<compile_context>
chip_gen: v7x
topology: tpu7x:2x2x1
jax: 0.10.0
libtpu: 0.0.40
codegen_flags: <defaults>
</compile_context>

<pallas_src>
import jax
import jax.numpy as jnp
from jax.experimental import pallas as pl
from jax.experimental.pallas import tpu as pltpu


def _round_up(n, m):
    return ((n + m - 1) // m) * m


def classifier_kernel(x_ref, af_ref, w2x_ref, w1a_ref, b2_ref, w3_ref,
                      o_ref, afp_ref):
    cdt = w2x_ref.dtype                       # compute dtype (bf16)
    f = af_ref.shape[-1]                      # true feature width (156)

    # Stage the f32 feature tile into a zero-padded, MXU-aligned bf16 scratch.
    # Re-written every grid step (no cross-iteration state), so it is correct
    # regardless of how the "parallel" grid axis is sharded across TensorCores.
    if afp_ref.shape[-1] > f:
        afp_ref[...] = jnp.zeros_like(afp_ref)
    afp_ref[:, :f] = af_ref[...].astype(cdt)

    # h = tanh(x @ W2x + af @ W1a + b2') -- two independent bf16 MXU matmuls,
    # f32 accumulation; activations cast f32->bf16 in-register (not in the
    # wrapper, so no extra HBM pass).  Bias add / tanh stay f32 (VPU/EUP).
    h = (jnp.dot(x_ref[...].astype(cdt), w2x_ref[...],
                 preferred_element_type=jnp.float32)
         + jnp.dot(afp_ref[...], w1a_ref[...],
                   preferred_element_type=jnp.float32)
         + b2_ref[...])
    h = jnp.tanh(h)

    # Final bias-free Linear; output tile is lane-dense (width padded to 128)
    # and written directly in the (bf16) output dtype.
    o_ref[...] = jnp.dot(h.astype(cdt), w3_ref[...],
                         preferred_element_type=jnp.float32).astype(o_ref.dtype)


def prepare_params(params, *, compute_dtype=jnp.bfloat16, lane=128, k_align=256):
    """One-time fold / cast / pad of the PyTorch-equivalent parameters."""
    w1, b1, w2, b2, w3 = (params["w1"], params["b1"], params["w2"],
                          params["b2"], params["w3"])
    F, C = w1.shape
    num_classes = w3.shape[1]
    w2x = w2[:C, :]                       # half of W2 acting on x
    w2a = w2[C:, :]                       # half of W2 acting on the transformed feature
    w1a = w1 @ w2a                        # folded Linear1 @ Linear2a   (F, C)
    b2f = b2 + b1 @ w2a                   # folded bias                 (C,)

    f_pad = _round_up(F, k_align)         # MXU-aligned contraction width
    w1a_p = jnp.pad(w1a, ((0, f_pad - F), (0, 0)))

    n_pad = _round_up(num_classes, lane)  # lane-dense output width
    w3_p = jnp.pad(w3, ((0, 0), (0, n_pad - num_classes)))

    return {
        "w2x": w2x.astype(compute_dtype),
        "w1a": w1a_p.astype(compute_dtype),
        "b2": b2f.astype(jnp.float32).reshape(1, C),
        "w3": w3_p.astype(compute_dtype),
        "num_classes": num_classes,
    }


def _choose_batch_tile(B, block_b):
    """Batch tile: never exceeds B, multiple of 16 when possible, and splits
    the batch into >=2 grid steps when B allows (megacore on v7x)."""
    if B <= 16:
        return B                          # single full-extent block (always legal)
    tb = min(block_b, _round_up(pl.cdiv(B, 2), 16))
    return min(tb, B)


def custom_classifier_forward(x, additional_feature, fused, *,
                              block_b=1024, out_dtype=jnp.bfloat16):
    """x: (B, C) pooled backbone features, additional_feature: (B, F), both f32.

    Returns lane-padded logits of shape (B, n_pad) in `out_dtype`.  Columns
    >= fused["num_classes"] are exactly zero (zero-padded, bias-free W3); the
    consumer should slice or mask them (no extra HBM pass is added here).
    """
    B, C = x.shape
    F = additional_feature.shape[1]
    w2x, w1a, b2, w3 = fused["w2x"], fused["w1a"], fused["b2"], fused["w3"]
    f_pad = w1a.shape[0]
    n_pad = w3.shape[1]
    cdt = w2x.dtype

    tb = _choose_batch_tile(B, block_b)
    grid = (pl.cdiv(B, tb),)              # ragged last block handled by Pallas

    # Rough VMEM footprint: double-buffered streamed tiles + resident weights
    # + af staging scratch.  Only raise the scoped limit if we would brush the
    # smallest default (16 MiB on v5e); otherwise leave the compiler defaults.
    cdtb = jnp.dtype(cdt).itemsize
    outb = jnp.dtype(out_dtype).itemsize
    est = (2 * tb * (x.dtype.itemsize * C
                     + additional_feature.dtype.itemsize * F
                     + outb * n_pad)
           + 2 * cdtb * (C * C + f_pad * C + C * n_pad) + 2 * 4 * C
           + cdtb * tb * f_pad)
    vlim = None
    if est > 12 * 1024 * 1024:
        vlim = min(2 * est, 96 * 1024 * 1024)

    out_padded = pl.pallas_call(
        classifier_kernel,
        out_shape=jax.ShapeDtypeStruct((B, n_pad), out_dtype),
        grid_spec=pltpu.PrefetchScalarGridSpec(
            num_scalar_prefetch=0,
            grid=grid,
            in_specs=[
                pl.BlockSpec((tb, C), lambda i: (i, 0)),       # x tile (f32, streamed)
                pl.BlockSpec((tb, F), lambda i: (i, 0)),       # af tile (f32, streamed)
                pl.BlockSpec((C, C), lambda i: (0, 0)),        # W2x (VMEM resident)
                pl.BlockSpec((f_pad, C), lambda i: (0, 0)),    # W1a (VMEM resident, K-padded)
                pl.BlockSpec((1, C), lambda i: (0, 0)),        # b2' (VMEM resident)
                pl.BlockSpec((C, n_pad), lambda i: (0, 0)),    # W3  (VMEM resident)
            ],
            out_specs=pl.BlockSpec((tb, n_pad), lambda i: (i, 0)),
            scratch_shapes=[pltpu.VMEM((tb, f_pad), cdt)],     # af staging buffer
        ),
        compiler_params=pltpu.CompilerParams(
            dimension_semantics=("parallel",),                 # megacore on v7x
            vmem_limit_bytes=vlim),
    )(x, additional_feature, w2x, w1a, b2, w3)

    return out_padded


def init_params(key, block_channels, additional_feature_dim, num_classes):
    k1, k2, k3, k4, k5 = jax.random.split(key, 5)
    # Deterministic synthetic params, stored (in_features, out_features)
    # (PyTorch nn.Linear stores (out, in); transposed at construction time).
    w1 = jax.random.normal(k1, (additional_feature_dim, block_channels),
                           jnp.float32) * 0.05
    b1 = jax.random.normal(k2, (block_channels,), jnp.float32) * 0.05
    w2 = jax.random.normal(k3, (2 * block_channels, block_channels),
                           jnp.float32) * 0.05
    b2 = jax.random.normal(k4, (block_channels,), jnp.float32) * 0.05
    w3 = jax.random.normal(k5, (block_channels, num_classes),
                           jnp.float32) * 0.05
    return {"w1": w1, "b1": b1, "w2": w2, "b2": b2, "w3": w3}


def reference_forward(x, additional_feature, params):
    # Pure-f32 mirror of the PyTorch module.
    af_t = additional_feature @ params["w1"] + params["b1"]
    combined = jnp.concatenate([x, af_t], axis=1)
    h = jnp.tanh(combined @ params["w2"] + params["b2"])
    return h @ params["w3"]


if __name__ == "__main__":
    # Small shapes consistent with the module (block_channels scaled down).
    batch = 8
    block_channels = 32
    additional_feature_dim = 156
    num_classes = 10

    key = jax.random.PRNGKey(0)
    kx, ka, kp = jax.random.split(key, 3)
    x = jax.random.normal(kx, (batch, block_channels), jnp.float32)
    additional_feature = jax.random.normal(
        ka, (batch, additional_feature_dim), jnp.float32)
    params = init_params(kp, block_channels, additional_feature_dim, num_classes)
    fused = prepare_params(params)        # fold / cast / pad done once

    out_padded = custom_classifier_forward(x, additional_feature, fused)
    out_padded = jax.block_until_ready(out_padded)

    nc = fused["num_classes"]
    # Consumer-side view of the logits (the kernel itself never pays for this
    # slice; a downstream loss would read/mask the padded buffer directly).
    logits = out_padded[:, :nc].astype(jnp.float32)

    ref = reference_forward(x, additional_feature, params)
    assert out_padded.shape == (batch, fused["w3"].shape[1])
    assert logits.shape == (batch, nc)
    # bf16 MXU operands / bf16 output (f32 accumulation) + the W1@W2a fold
    # shift results by ~1e-3 vs. the pure-f32 reference; tolerance is loose
    # enough for that and tight enough to catch real bugs (outputs are O(0.1)).
    assert jnp.allclose(logits, ref, atol=3e-2, rtol=3e-2), "mismatch vs reference"

    print("KERNEL_OK")
</pallas_src>

<mosaic_0001>
module attributes {stable_mosaic.version = 11 : i64} {
  func.func @classifier_kernel(%arg0: i32, %arg1: memref<8x32xf32, #tpu.memory_space<vmem>>, %arg2: memref<8x156xf32, #tpu.memory_space<vmem>>, %arg3: memref<32x32xbf16, #tpu.memory_space<vmem>>, %arg4: memref<256x32xbf16, #tpu.memory_space<vmem>>, %arg5: memref<1x32xf32, #tpu.memory_space<vmem>>, %arg6: memref<32x128xbf16, #tpu.memory_space<vmem>>, %arg7: memref<8x128xbf16, #tpu.memory_space<vmem>>, %arg8: memref<8x256xbf16, #tpu.memory_space<vmem>>) attributes {dimension_semantics = [#tpu.dimension_semantics<parallel>], iteration_bounds = array<i64: 1>, scalar_prefetch = 0 : i64, scratch_operands = 1 : i64, tpu.core_type = #tpu.core_type<tc>, window_params = [{transform_indices = @transform_0, window_bounds = array<i64: 8, 32>}, {transform_indices = @transform_1, window_bounds = array<i64: 8, 156>}, {pipeline_mode = #tpu.pipeline_mode<synchronous>, transform_indices = @transform_2, window_bounds = array<i64: 32, 32>}, {pipeline_mode = #tpu.pipeline_mode<synchronous>, transform_indices = @transform_3, window_bounds = array<i64: 256, 32>}, {pipeline_mode = #tpu.pipeline_mode<synchronous>, transform_indices = @transform_4, window_bounds = array<i64: 1, 32>}, {pipeline_mode = #tpu.pipeline_mode<synchronous>, transform_indices = @transform_5, window_bounds = array<i64: 32, 128>}, {transform_indices = @transform_6, window_bounds = array<i64: 8, 128>}]} {
    %cst = arith.constant 0.000000e+00 : bf16
    %0 = vector.broadcast %cst : bf16 to vector<8x256xbf16>
    %c0 = arith.constant 0 : index
    %c0_0 = arith.constant 0 : index
    %1 = vector.load %arg8[%c0, %c0_0] : memref<8x256xbf16, #tpu.memory_space<vmem>>, vector<8x256xbf16>
    tpu.vector_store %arg8[%c0, %c0_0], %0 {strides = array<i32>} : memref<8x256xbf16, #tpu.memory_space<vmem>>, vector<8x256xbf16>,
    %c0_1 = arith.constant 0 : index
    %c0_2 = arith.constant 0 : index
    %2 = vector.load %arg2[%c0_1, %c0_2] : memref<8x156xf32, #tpu.memory_space<vmem>>, vector<8x156xf32>
    %3 = arith.truncf %2 : vector<8x156xf32> to vector<8x156xbf16>
    %c0_3 = arith.constant 0 : index
    %c0_4 = arith.constant 0 : index
    %4 = vector.load %arg8[%c0_3, %c0_4] : memref<8x256xbf16, #tpu.memory_space<vmem>>, vector<8x156xbf16>
    tpu.vector_store %arg8[%c0_3, %c0_4], %3 {strides = array<i32>} : memref<8x256xbf16, #tpu.memory_space<vmem>>, vector<8x156xbf16>,
    %c0_5 = arith.constant 0 : index
    %c0_6 = arith.constant 0 : index
    %5 = vector.load %arg1[%c0_5, %c0_6] : memref<8x32xf32, #tpu.memory_space<vmem>>, vector<8x32xf32>
    %6 = arith.truncf %5 : vector<8x32xf32> to vector<8x32xbf16>
    %c0_7 = arith.constant 0 : index
    %c0_8 = arith.constant 0 : index
    %7 = vector.load %arg3[%c0_7, %c0_8] : memref<32x32xbf16, #tpu.memory_space<vmem>>, vector<32x32xbf16>
    %cst_9 = arith.constant dense<0.000000e+00> : vector<8x32xf32>
    %8 = tpu.matmul %6, %7, %cst_9 {dimension_numbers = #tpu.dot_dimension_numbers<[1], [0], [0], [1], [0, 0, 1, 1], [], []>} : vector<8x32xbf16>, vector<32x32xbf16>, vector<8x32xf32> -> vector<8x32xf32>
    %c0_10 = arith.constant 0 : index
    %c0_11 = arith.constant 0 : index
    %9 = vector.load %arg8[%c0_10, %c0_11] : memref<8x256xbf16, #tpu.memory_space<vmem>>, vector<8x256xbf16>
    %c0_12 = arith.constant 0 : index
    %c0_13 = arith.constant 0 : index
    %10 = vector.load %arg4[%c0_12, %c0_13] : memref<256x32xbf16, #tpu.memory_space<vmem>>, vector<256x32xbf16>
    %cst_14 = arith.constant dense<0.000000e+00> : vector<8x32xf32>
    %11 = tpu.matmul %9, %10, %cst_14 {dimension_numbers = #tpu.dot_dimension_numbers<[1], [0], [0], [1], [0, 0, 1, 1], [], []>} : vector<8x256xbf16>, vector<256x32xbf16>, vector<8x32xf32> -> vector<8x32xf32>
    %12 = arith.addf %8, %11 : vector<8x32xf32>
    %c0_15 = arith.constant 0 : index
    %c0_16 = arith.constant 0 : index
    %13 = vector.load %arg5[%c0_15, %c0_16] : memref<1x32xf32, #tpu.memory_space<vmem>>, vector<1x32xf32>
    %14 = vector.broadcast %13 : vector<1x32xf32> to vector<8x32xf32>
    %15 = arith.addf %12, %14 : vector<8x32xf32>
    %16 = math.tanh %15 : vector<8x32xf32>
    %17 = arith.truncf %16 : vector<8x32xf32> to vector<8x32xbf16>
    %c0_17 = arith.constant 0 : index
    %c0_18 = arith.constant 0 : index
    %18 = vector.load %arg6[%c0_17, %c0_18] : memref<32x128xbf16, #tpu.memory_space<vmem>>, vector<32x128xbf16>
    %cst_19 = arith.constant dense<0.000000e+00> : vector<8x128xf32>
    %19 = tpu.matmul %17, %18, %cst_19 {dimension_numbers = #tpu.dot_dimension_numbers<[1], [0], [0], [1], [0, 0, 1, 1], [], []>} : vector<8x32xbf16>, vector<32x128xbf16>, vector<8x128xf32> -> vector<8x128xf32>
    %20 = arith.truncf %19 : vector<8x128xf32> to vector<8x128xbf16>
    %c0_20 = arith.constant 0 : index
    %c0_21 = arith.constant 0 : index
    %21 = vector.load %arg7[%c0_20, %c0_21] : memref<8x128xbf16, #tpu.memory_space<vmem>>, vector<8x128xbf16>
    tpu.vector_store %arg7[%c0_20, %c0_21], %20 {strides = array<i32>} : memref<8x128xbf16, #tpu.memory_space<vmem>>, vector<8x128xbf16>,
    return
  }
  func.func @transform_0(%arg0: i32) -> (i32, i32) {
    %c0_i32 = arith.constant 0 : i32
    %c0_i32_0 = arith.constant 0 : i32
    return %arg0, %c0_i32 : i32, i32
  }
  func.func @transform_1(%arg0: i32) -> (i32, i32) {
    %c0_i32 = arith.constant 0 : i32
    %c0_i32_0 = arith.constant 0 : i32
    return %arg0, %c0_i32 : i32, i32
  }
  func.func @transform_2(%arg0: i32) -> (i32, i32) {
    %c0_i32 = arith.constant 0 : i32
    %c0_i32_0 = arith.constant 0 : i32
    %c0_i32_1 = arith.constant 0 : i32
    return %c0_i32, %c0_i32_0 : i32, i32
  }
  func.func @transform_3(%arg0: i32) -> (i32, i32) {
    %c0_i32 = arith.constant 0 : i32
    %c0_i32_0 = arith.constant 0 : i32
    %c0_i32_1 = arith.constant 0 : i32
    return %c0_i32, %c0_i32_0 : i32, i32
  }
  func.func @transform_4(%arg0: i32) -> (i32, i32) {
    %c0_i32 = arith.constant 0 : i32
    %c0_i32_0 = arith.constant 0 : i32
    %c0_i32_1 = arith.constant 0 : i32
    return %c0_i32, %c0_i32_0 : i32, i32
  }
  func.func @transform_5(%arg0: i32) -> (i32, i32) {
    %c0_i32 = arith.constant 0 : i32
    %c0_i32_0 = arith.constant 0 : i32
    %c0_i32_1 = arith.constant 0 : i32
    return %c0_i32, %c0_i32_0 : i32, i32
  }
  func.func @transform_6(%arg0: i32) -> (i32, i32) {
    %c0_i32 = arith.constant 0 : i32
    %c0_i32_0 = arith.constant 0 : i32
    return %arg0, %c0_i32 : i32, i32
  }
}

</mosaic_0001>

<llo_original>
// kernel: tpu_custom_call.1
$region0: #{tpu_custom_call.1}
  #allocation0 [shape = 'u32[]', space=smem, size = 0x4, offset = 0x4, fixed_abs, tag = 'smem constant byte address 0x4 - core index']
  #allocation1 [shape = 'u32[144,128]{1,0:T(1,128)}', space=vmem, size = 0x12000, scoped, tag = 'internal scratch']
  #allocation2 [shape = 'bf16[8,256]{1,0:T(8,128)(2,1)}', space=vmem, size = 0x1000, scoped, tag = 'scratch operand']
  %s0 = inlined_call_operand.vmem [shape: f32[8,32], index: 0, kind: input, shape index: {}]
  %s1 = inlined_call_operand.vmem [shape: f32[8,156], index: 1, kind: input, shape index: {}]
  %s2 = inlined_call_operand.vmem [shape: bf16[32,32], index: 2, kind: input, shape index: {}]
  %s3 = inlined_call_operand.vmem [shape: bf16[256,32], index: 3, kind: input, shape index: {}]
  %s4 = inlined_call_operand.vmem [shape: f32[1,32], index: 4, kind: input, shape index: {}]
  %s5 = inlined_call_operand.vmem [shape: bf16[32,128], index: 5, kind: input, shape index: {}]
  %s6 = inlined_call_operand.hbm [shape: bf16[8,128], index: 6, kind: output, shape index: {}]
  %s7 = sld [smem:[#allocation0]]
  $region34: #{tpu_custom_call.1} parent=0
    _
  %s9 = ssub.s32 1, %s7
  %s10 = scalar_select 0, %s9, %s7
  $region1: #{tpu_custom_call.1} parent=0
    #allocation3 [shape = 'u8[2048]{0}', space=vmem, size = 0x800, scoped, tag = 'output window, operand 0, single buffered']
    #allocation4 [shape = 's32[1]{0}', space=sflag, size = 0x4, scoped, tag = 'scoped memory for tpu_custom_call.1']
    %11 = vsyncpa [#allocation4], 0
    // Predicated region
    $region2: #{tpu_custom_call.1} parent=1 // pred_check
      _
    $region3: #{tpu_custom_call.1} parent=1 // pred_check_branch
      %13 = sbr.rel (0) target = $region5
    $region4: #{tpu_custom_call.1} parent=1 // pred_region
      _
    $region5: #{tpu_custom_call.1} parent=1 // pred_fallthru
      _
    // Predicated region
    $region6: #{tpu_custom_call.1} parent=1 // pred_check
      _
    $region7: #{tpu_custom_call.1} parent=1 // pred_check_branch
      %15 = sbr.rel (0) target = $region9
    $region8: #{tpu_custom_call.1} parent=1 // pred_region
      _
    $region9: #{tpu_custom_call.1} parent=1 // pred_fallthru
      _
    // Predicated region
    $region10: #{tpu_custom_call.1} parent=1 // pred_check
      _
    $region11: #{tpu_custom_call.1} parent=1 // pred_check_branch
      %17 = sbr.rel (0) target = $region13
    $region12: #{tpu_custom_call.1} parent=1 // pred_region
      _
    $region13: #{tpu_custom_call.1} parent=1 // pred_fallthru
      _
    // Predicated region
    $region14: #{tpu_custom_call.1} parent=1 // pred_check
      _
    $region15: #{tpu_custom_call.1} parent=1 // pred_check_branch
      %19 = sbr.rel (0) target = $region17
    $region16: #{tpu_custom_call.1} parent=1 // pred_region
      _
    $region17: #{tpu_custom_call.1} parent=1 // pred_fallthru
      _
    // Predicated region
    $region18: #{tpu_custom_call.1} parent=1 // pred_check
      _
    $region19: #{tpu_custom_call.1} parent=1 // pred_check_branch
      %21 = sbr.rel (0) target = $region21
    $region20: #{tpu_custom_call.1} parent=1 // pred_region
      _
    $region21: #{tpu_custom_call.1} parent=1 // pred_fallthru
      _
    // Predicated region
    $region22: #{tpu_custom_call.1} parent=1 // pred_check
      _
    $region23: #{tpu_custom_call.1} parent=1 // pred_check_branch
      %23 = sbr.rel (0) target = $region25
    $region24: #{tpu_custom_call.1} parent=1 // pred_region
      _
    $region25: #{tpu_custom_call.1} parent=1 // pred_fallthru
      _
    %25 = vst [vmem:[#allocation2] sm:$0xff] 0
    %v26 = vld [vmem:[%s1] sm:$0xff]
    %v27 = vld [vmem:[%s1 + $0x8] sm:$0xff]
    %v28 = vpack.c.bf16 %v26, %v26
    %v29 = vpack.c.bf16 %v27, %v27
    %v32 = vunpack.c.l.b16 %v28
    %v33 = vunpack.c.l.b16 %v29
    %v34 = vpack.c.b16 %v33, %v32
    %vm36 = vcmask 1043456
    %vm37 = vcmask 228356
    %vm38 = vmor %vm37, %vm36
    %39 = vst.msk [vmem:[#allocation2] sm:$0xff] %vm38, %v34
    %v40 = vld [vmem:[%s0] sm:$0xff]
    %v41 = vpack.c.bf16 %v40, %v40
    %v42 = vld [vmem:[%s2] sm:$0xf]
    %v43 = vld [vmem:[%s2 + $0x4] sm:$0xf]
    %v44 = vld [vmem:[%s2 + $0x8] sm:$0xf]
    %v45 = vld [vmem:[%s2 + $0xc] sm:$0xf]
    %v46 = vld [vmem:[#allocation2] sm:$0xff]
    %v47 = vld [vmem:[%s3] sm:$0xf]
    %v48 = vld [vmem:[%s3 + $0x4] sm:$0xf]
    %v49 = vld [vmem:[%s3 + $0x8] sm:$0xf]
    %v50 = vld [vmem:[%s3 + $0xc] sm:$0xf]
    %v51 = vld [vmem:[%s3 + $0x10] sm:$0xf]
    %v52 = vld [vmem:[%s3 + $0x14] sm:$0xf]
    %v53 = vld [vmem:[%s3 + $0x18] sm:$0xf]
    %v54 = vld [vmem:[%s3 + $0x1c] sm:$0xf]
    %v55 = vld [vmem:[%s3 + $0x20] sm:$0xf]
    %v56 = vld [vmem:[%s3 + $0x24] sm:$0xf]
    %v57 = vld [vmem:[%s3 + $0x28] sm:$0xf]
    %v58 = vld [vmem:[%s3 + $0x2c] sm:$0xf]
    %v59 = vld [vmem:[%s3 + $0x30] sm:$0xf]
    %v60 = vld [vmem:[%s3 + $0x34] sm:$0xf]
    %v61 = vld [vmem:[%s3 + $0x38] sm:$0xf]
    %v62 = vld [vmem:[%s3 + $0x3c] sm:$0xf]
    %v63 = vld [vmem:[%s3 + $0x40] sm:$0xf]
    %v64 = vld [vmem:[%s3 + $0x44] sm:$0xf]
    %v65 = vld [vmem:[%s3 + $0x48] sm:$0xf]
    %v66 = vld [vmem:[%s3 + $0x4c] sm:$0xf]
    %v67 = vld [vmem:[%s3 + $0x50] sm:$0xf]
    %v68 = vld [vmem:[%s3 + $0x54] sm:$0xf]
    %v69 = vld [vmem:[%s3 + $0x58] sm:$0xf]
    %v70 = vld [vmem:[%s3 + $0x5c] sm:$0xf]
    %v71 = vld [vmem:[%s3 + $0x60] sm:$0xf]
    %v72 = vld [vmem:[%s3 + $0x64] sm:$0xf]
    %v73 = vld [vmem:[%s3 + $0x68] sm:$0xf]
    %v74 = vld [vmem:[%s3 + $0x6c] sm:$0xf]
    %v75 = vld [vmem:[%s3 + $0x70] sm:$0xf]
    %v76 = vld [vmem:[%s3 + $0x74] sm:$0xf]
    %v77 = vld [vmem:[%s3 + $0x78] sm:$0xf]
    %v78 = vld [vmem:[%s3 + $0x7c] sm:$0xf]
    %v80 = vunpack.c.l.b16 %v46
    %v81 = vunpack.c.h.b16 %v46
    %v82 = vpack.c.b16 %v80, %v80
    %v83 = vpack.c.b16 %v81, %v81
    %v118 = vunpack.c.l.b16 %v47
    %v119 = vunpack.c.l.b16 %v48
    %v120 = vunpack.c.l.b16 %v49
    %v121 = vunpack.c.l.b16 %v50
    %v122 = vunpack.c.l.b16 %v51
    %v123 = vunpack.c.l.b16 %v52
    %v124 = vunpack.c.l.b16 %v53
    %v125 = vunpack.c.l.b16 %v54
    %v126 = vunpack.c.l.b16 %v55
    %v127 = vunpack.c.l.b16 %v56
    %v128 = vunpack.c.l.b16 %v57
    %v129 = vunpack.c.l.b16 %v58
    %v130 = vunpack.c.l.b16 %v59
    %v131 = vunpack.c.l.b16 %v60
    %v132 = vunpack.c.l.b16 %v61
    %v133 = vunpack.c.l.b16 %v62
    %v134 = vunpack.c.l.b16 %v63
    %v135 = vunpack.c.l.b16 %v64
    %v136 = vunpack.c.l.b16 %v65
    %v137 = vunpack.c.l.b16 %v66
    %v138 = vunpack.c.l.b16 %v67
    %v139 = vunpack.c.l.b16 %v68
    %v140 = vunpack.c.l.b16 %v69
    %v141 = vunpack.c.l.b16 %v70
    %v142 = vunpack.c.l.b16 %v71
    %v143 = vunpack.c.l.b16 %v72
    %v144 = vunpack.c.l.b16 %v73
    %v145 = vunpack.c.l.b16 %v74
    %v146 = vunpack.c.l.b16 %v75
    %v147 = vunpack.c.l.b16 %v76
    %v148 = vunpack.c.l.b16 %v77
    %v149 = vunpack.c.l.b16 %v78
    %v150 = vpack.c.b16 %v119, %v118
    %v151 = vpack.c.b16 %v121, %v120
    %v152 = vpack.c.b16 %v123, %v122
    %v153 = vpack.c.b16 %v125, %v124
    %v154 = vpack.c.b16 %v127, %v126
    %v155 = vpack.c.b16 %v129, %v128
    %v156 = vpack.c.b16 %v131, %v130
    %v157 = vpack.c.b16 %v133, %v132
    %v158 = vpack.c.b16 %v135, %v134
    %v159 = vpack.c.b16 %v137, %v136
    %v160 = vpack.c.b16 %v139, %v138
    %v161 = vpack.c.b16 %v141, %v140
    %v162 = vpack.c.b16 %v143, %v142
    %v163 = vpack.c.b16 %v145, %v144
    %v164 = vpack.c.b16 %v147, %v146
    %v165 = vpack.c.b16 %v149, %v148
    %182 = vmatprep.subr.bf16.mxu0 0
    %183 = vmatpush1.bf16.msra.mxu0 %v150
    %184 = vmatprep.subr.bf16.mxu0 0
    %185 = vmatpush1.bf16.msra.mxu0 %v151
    %186 = vmatprep.subr.bf16.mxu0 0
    %187 = vmatpush1.bf16.msra.mxu0 %v152
    %188 = vmatprep.subr.bf16.mxu0 0
    %189 = vmatpush1.bf16.msra.mxu0 %v153
    %190 = vmatprep.subr.bf16.mxu0 0
    %191 = vmatpush1.bf16.msra.mxu0 %v154
    %192 = vmatprep.subr.bf16.mxu0 0
    %193 = vmatpush1.bf16.msra.mxu0 %v155
    %194 = vmatprep.subr.bf16.mxu0 0
    %195 = vmatpush1.bf16.msra.mxu0 %v156
    %196 = vmatprep.subr.bf16.mxu0 0
    %197 = vmatpush1.bf16.msra.mxu0 %v157
    %198 = vmatprep.subr.bf16.mxu0 0
    %199 = vmatpush1.bf16.msra.mxu0 %v158
    %200 = vmatprep.subr.bf16.mxu0 0
    %201 = vmatpush1.bf16.msra.mxu0 %v159
    %202 = vmatprep.subr.bf16.mxu0 0
    %203 = vmatpush1.bf16.msra.mxu0 %v160
    %204 = vmatprep.subr.bf16.mxu0 0
    %205 = vmatpush1.bf16.msra.mxu0 %v161
    %206 = vmatprep.subr.bf16.mxu0 0
    %207 = vmatpush1.bf16.msra.mxu0 %v162
    %208 = vmatprep.subr.bf16.mxu0 0
    %209 = vmatpush1.bf16.msra.mxu0 %v163
    %210 = vmatprep.subr.bf16.mxu0 0
    %211 = vmatpush1.bf16.msra.mxu0 %v164
    %212 = vmatprep.subr.bf16.mxu0 0
    %213 = vmatpush1.bf16.msra.mxu0 %v165
    %214 = vmatprep.mubr.bf16.mxu0 %v83
    %215 = vmatmul.mubr.bf16.gmra.mrb[0].mxu0 %v82
    %v216 = vpop.f32.mrb[0].mxu0
    %v217 = vadd.f32 0.0, %v216
    %v218 = vpop.f32.mrb[0].mxu0
    %v219 = vpop.f32.mrb[0].mxu0
    %v220 = vpop.f32.mrb[0].mxu0
    %221 = vdwg.mxu0
    %v226 = vunpack.c.l.b16 %v42
    %v227 = vunpack.c.l.b16 %v43
    %v228 = vunpack.c.l.b16 %v44
    %v229 = vunpack.c.l.b16 %v45
    %v230 = vpack.c.b16 %v227, %v226
    %v231 = vpack.c.b16 %v229, %v228
    %vm234 = vcmask 261120
    %v236 = vsel %vm234, %v41, 0
    %238 = vmatprep.subr.bf16.mxu0 0
    %239 = vmatpush1.bf16.msra.mxu0 %v230
    %240 = vmatprep.subr.bf16.mxu0 0
    %241 = vmatpush1.bf16.msra.mxu0 %v231
    %242 = vmatprep.subr.bf16.mxu0 0
    %243 = vmatpush1.bf16.msra.mxu0 0
    %244 = vmatprep.subr.bf16.mxu0 0
    %245 = vmatpush1.bf16.msra.mxu0 0
    %246 = vmatprep.subr.bf16.mxu0 0
    %247 = vmatpush1.bf16.msra.mxu0 0
    %248 = vmatprep.subr.bf16.mxu0 0
    %249 = vmatpush1.bf16.msra.mxu0 0
    %250 = vmatprep.subr.bf16.mxu0 0
    %251 = vmatpush1.bf16.msra.mxu0 0
    %252 = vmatprep.subr.bf16.mxu0 0
    %253 = vmatpush1.bf16.msra.mxu0 0
    %254 = vmatprep.subr.bf16.mxu0 0
    %255 = vmatpush1.bf16.msra.mxu0 0
    %256 = vmatprep.subr.bf16.mxu0 0
    %257 = vmatpush1.bf16.msra.mxu0 0
    %258 = vmatprep.subr.bf16.mxu0 0
    %259 = vmatpush1.bf16.msra.mxu0 0
    %260 = vmatprep.subr.bf16.mxu0 0
    %261 = vmatpush1.bf16.msra.mxu0 0
    %262 = vmatprep.subr.bf16.mxu0 0
    %263 = vmatpush1.bf16.msra.mxu0 0
    %264 = vmatprep.subr.bf16.mxu0 0
    %265 = vmatpush1.bf16.msra.mxu0 0
    %266 = vmatprep.subr.bf16.mxu0 0
    %267 = vmatpush1.bf16.msra.mxu0 0
    %268 = vmatprep.subr.bf16.mxu0 0
    %269 = vmatpush1.bf16.msra.mxu0 0
    %270 = vmatprep.mubr.bf16.mxu0 0
    %271 = vmatmul.mubr.bf16.gmra.mrb[0].mxu0 %v236
    %v272 = vpop.f32.mrb[0].mxu0
    %v273 = vadd.f32 %v217, %v272
    %v274 = vpop.f32.mrb[0].mxu0
    %v275 = vpop.f32.mrb[0].mxu0
    %v276 = vpop.f32.mrb[0].mxu0
    %277 = vdwg.mxu0
    %v278 = vld [vmem:[%s4] sm:$0x1]
    %v280 = vlaneseq
    %v281 = vshrl.u32 %v280, 7
    %v282 = vsub.s32 0, %v281
    %v283 = vrot.slane %v278, %v282
    %v285 = vadd.f32 %v273, %v283
    %v286 = vtanh.pop %v285
    %v287 = vpack.c.bf16 %v286, %v286
    %v288 = vld [vmem:[%s5] sm:$0xf]
    %v289 = vld [vmem:[%s5 + $0x4] sm:$0xf]
    %v290 = vld [vmem:[%s5 + $0x8] sm:$0xf]
    %v291 = vld [vmem:[%s5 + $0xc] sm:$0xf]
    %v296 = vunpack.c.l.b16 %v288
    %v297 = vunpack.c.l.b16 %v289
    %v298 = vunpack.c.l.b16 %v290
    %v299 = vunpack.c.l.b16 %v291
    %v300 = vpack.c.b16 %v297, %v296
    %v301 = vpack.c.b16 %v299, %v298
    %v305 = vsel %vm234, %v287, 0
    %307 = vmatprep.subr.bf16.mxu0 0
    %308 = vmatpush1.bf16.msra.mxu0 %v300
    %309 = vmatprep.subr.bf16.mxu0 0
    %310 = vmatpush1.bf16.msra.mxu0 %v301
    %311 = vmatprep.subr.bf16.mxu0 0
    %312 = vmatpush1.bf16.msra.mxu0 0
    %313 = vmatprep.subr.bf16.mxu0 0
    %314 = vmatpush1.bf16.msra.mxu0 0
    %315 = vmatprep.subr.bf16.mxu0 0
    %316 = vmatpush1.bf16.msra.mxu0 0
    %317 = vmatprep.subr.bf16.mxu0 0
    %318 = vmatpush1.bf16.msra.mxu0 0
    %319 = vmatprep.subr.bf16.mxu0 0
    %320 = vmatpush1.bf16.msra.mxu0 0
    %321 = vmatprep.subr.bf16.mxu0 0
    %322 = vmatpush1.bf16.msra.mxu0 0
    %323 = vmatprep.subr.bf16.mxu0 0
    %324 = vmatpush1.bf16.msra.mxu0 0
    %325 = vmatprep.subr.bf16.mxu0 0
    %326 = vmatpush1.bf16.msra.mxu0 0
    %327 = vmatprep.subr.bf16.mxu0 0
    %328 = vmatpush1.bf16.msra.mxu0 0
    %329 = vmatprep.subr.bf16.mxu0 0
    %330 = vmatpush1.bf16.msra.mxu0 0
    %331 = vmatprep.subr.bf16.mxu0 0
    %332 = vmatpush1.bf16.msra.mxu0 0
    %333 = vmatprep.subr.bf16.mxu0 0
    %334 = vmatpush1.bf16.msra.mxu0 0
    %335 = vmatprep.subr.bf16.mxu0 0
    %336 = vmatpush1.bf16.msra.mxu0 0
    %337 = vmatprep.subr.bf16.mxu0 0
    %338 = vmatpush1.bf16.msra.mxu0 0
    %339 = vmatprep.mubr.bf16.mxu0 0
    %340 = vmatmul.mubr.bf16.gmra.mrb[0].mxu0 %v305
    %v341 = vpop.f32.mrb[0].mxu0
    %v342 = vadd.f32 0.0, %v341
    %v343 = vpop.f32.mrb[0].mxu0
    %v344 = vpop.f32.mrb[0].mxu0
    %v345 = vpop.f32.mrb[0].mxu0
    %346 = vdwg.mxu0
    %v347 = vpack.c.bf16 %v342, %v342
    %348 = vst [vmem:[#allocation3] sm:$0xf] %v347
    // Predicated region
    $region26: #{tpu_custom_call.1} parent=1 // pred_check
      _
    $region27: #{tpu_custom_call.1} parent=1 // pred_check_branch
      %350 = sbr.rel (0) target = $region29
    $region28: #{tpu_custom_call.1} parent=1 // pred_region
      %s352 = ssub.s32 64, 64
      %353 = vsyncadd [#allocation4], %s352
      %s355 = sshll.u32 [#allocation3], 4
      %s356 = int_to_ptr.vmem [resolvable:$true] %s355
      %358 = dma.vmem_to_hbm [thread:$0]  %s356, 64, %s6, [#allocation4]
    $region29: #{tpu_custom_call.1} parent=1 // pred_fallthru
      _
    // Predicated region
    $region30: #{tpu_custom_call.1} parent=1 // pred_check
      _
    $region31: #{tpu_custom_call.1} parent=1 // pred_check_branch
      %360 = sbr.rel (0) target = $region33
    $region32: #{tpu_custom_call.1} parent=1 // pred_region
      %361 = dma.done [#allocation4], 64
    $region33: #{tpu_custom_call.1} parent=1 // pred_fallthru
      _
    %362 = vsyncpa [#allocation4], 1

</llo_original>
